<compile_context>
chip_gen: v7x
topology: tpu7x:2x2x1
jax: 0.10.0
libtpu: 0.0.40
codegen_flags: <defaults>
</compile_context>

<pallas_src>
import functools

import jax
import jax.numpy as jnp
from jax import lax
from jax.experimental import pallas as pl
from jax.experimental.pallas import tpu as pltpu


def _round_up(a, m):
    return (a + m - 1) // m * m


def _cdiv(a, m):
    return (a + m - 1) // m


def _geo_key_kernel(loc_ref, rid_ref, m_ref, rep_ref, tt_ref, riota_ref,
                    bias_ref, out_ref, *, n_chunks, chunk_rows):
    # loc_ref  : [TNR, 2G]      raw (lat, lon) pairs, G tokens per row
    # rid_ref  : [TNR, G]       int32 region ids
    # m_ref    : [2G, 128]      interleave matrix with folded Linear weights
    # rep_ref  : [G, G*R_pad]   0/1 lane-replication matrix
    # tt_ref   : [G*R_pad, 128] interleaved, zero-padded embedding table
    # riota_ref: [1, G*R_pad]   precomputed lane//G iota (f32)
    # bias_ref : [1, 128]       folded bias pattern
    # out_ref  : [TNR, 128]     interleaved output (G tokens x 16 feats / row)
    m = m_ref[...]
    rep = rep_ref[...]
    tt = tt_ref[...]
    riota = riota_ref[...]
    bias = bias_ref[...]

    def chunk_body(ci, carry):
        r0 = pl.multiple_of(ci * chunk_rows, 8)
        loc = loc_ref[pl.ds(r0, chunk_rows), :]                        # [CR, 2G]
        rid = rid_ref[pl.ds(r0, chunk_rows), :].astype(jnp.float32)    # [CR, G]

        # coord part: Linear(2->6) with folded normalization, scattered to the
        # interleaved lane layout by the constant matrix M (MXU).
        coord = jnp.dot(loc, m, preferred_element_type=jnp.float32)    # [CR, 128]

        # region part: replicate ids across lanes (exact 0/1 matmul), build the
        # one-hot on the VPU, gather table rows via a second small matmul.
        rid_rep = jnp.dot(rid, rep, preferred_element_type=jnp.float32)
        onehot = (rid_rep == riota).astype(jnp.float32)                # [CR, G*R_pad]
        region = jnp.dot(onehot, tt, preferred_element_type=jnp.float32)

        out_ref[pl.ds(r0, chunk_rows), :] = coord + region + bias
        return carry

    lax.fori_loop(0, n_chunks, chunk_body, 0)


def geo_key_encoder(location, region_id, params, geo_range, *,
                    tile_tokens=32768, chunk_rows=256):
    """location: [B, S, 2] f32, region_id: [B, S] int -> [B, S, 16] f32."""
    B, S, two = location.shape
    assert two == 2
    N = B * S
    (lat_min, lat_max), (lon_min, lon_max) = geo_range

    wt = params["coord_w_t"].astype(jnp.float32)                 # [6, 2]
    b = params["coord_b"].astype(jnp.float32).reshape(-1)        # [6]
    tbl = params["region_table"].astype(jnp.float32)             # [R, 10]
    coord_dim = wt.shape[0]
    region_dim = tbl.shape[1]
    feat = coord_dim + region_dim                                # 16
    assert 128 % feat == 0 and chunk_rows % 8 == 0
    G = 128 // feat                                              # tokens per 128-lane row (8)
    R = tbl.shape[0]
    R_pad = _round_up(R, 128 // G)                               # G * R_pad multiple of 128
    kdim = G * R_pad

    # ---- fold normalization into the Linear (no per-token normalize) --------
    inv = jnp.array([1.0 / (float(lat_max) - float(lat_min)),
                     1.0 / (float(lon_max) - float(lon_min))], jnp.float32)
    a_fold = wt * inv[None, :]                                   # [6, 2]
    b_fold = b - a_fold[:, 0] * lat_min - a_fold[:, 1] * lon_min  # [6]

    # ---- constant interleave matrices (built once, lane-dense) --------------
    eyeg = jnp.eye(G, dtype=jnp.float32)
    a_pad = jnp.zeros((feat, 2), jnp.float32).at[:coord_dim, :].set(a_fold)
    # M[2t+c, feat*t'+f] = a_fold[f, c] * (t == t')
    m_mat = (eyeg[:, None, :, None] * a_pad.T[None, :, None, :]
             ).reshape(2 * G, G * feat)                          # [16, 128]
    tbl_pad = jnp.zeros((R_pad, feat), jnp.float32).at[:R, coord_dim:].set(tbl)
    # TT[G*r+t, feat*t'+f] = tbl_pad[r, f] * (t == t')
    tt_mat = (eyeg[None, :, :, None] * tbl_pad[:, None, None, :]
              ).reshape(kdim, G * feat)                          # [kdim, 128]
    lane = jnp.arange(kdim)
    rep_mat = (lane[None, :] % G == jnp.arange(G)[:, None]).astype(jnp.float32)
    riota = (lane // G).astype(jnp.float32)[None, :]             # [1, kdim]
    b_pad = jnp.zeros((feat,), jnp.float32).at[:coord_dim].set(b_fold)
    bias_pat = jnp.tile(b_pad, G)[None, :]                       # [1, 128]

    # ---- token-major inputs: pure reshapes of the natural layout ------------
    N8 = _cdiv(N, G)
    loc_rows = location.reshape(N, 2).astype(jnp.float32)
    rid_flat = region_id.reshape(N).astype(jnp.int32)
    pad_tok = N8 * G - N
    if pad_tok:
        loc_rows = jnp.pad(loc_rows, ((0, pad_tok), (0, 0)))
        rid_flat = jnp.pad(rid_flat, ((0, pad_tok),))
    loc8 = loc_rows.reshape(N8, 2 * G)                           # [N8, 16]
    rid8 = rid_flat.reshape(N8, G)                               # [N8, 8]

    # ---- tile selection: big tiles, chunked inner loop -----------------------
    if N8 <= chunk_rows:
        tnr = _round_up(N8, 8)
        cr = tnr
    else:
        tnr = min(_round_up(tile_tokens // G, chunk_rows),
                  _round_up(N8, chunk_rows))
        cr = chunk_rows
        if _round_up(N8, tnr) == tnr and tnr > chunk_rows:
            # split into >= 2 grid programs so ("parallel",) can use both
            # TensorCores on v7x (no-op on v5e / v6e).
            tnr = max(chunk_rows, _round_up(_cdiv(N8, 2), chunk_rows))
    n_chunks = tnr // cr
    n8_pad = _round_up(N8, tnr)
    if n8_pad != N8:
        loc8 = jnp.pad(loc8, ((0, n8_pad - N8), (0, 0)))
        rid8 = jnp.pad(rid8, ((0, n8_pad - N8), (0, 0)))
    grid = (n8_pad // tnr,)

    kernel = functools.partial(_geo_key_kernel, n_chunks=n_chunks,
                               chunk_rows=cr)
    out_rows = pl.pallas_call(
        kernel,
        out_shape=jax.ShapeDtypeStruct((n8_pad, 128), jnp.float32),
        grid=grid,
        in_specs=[
            pl.BlockSpec((tnr, 2 * G), lambda i: (i, 0)),        # location rows
            pl.BlockSpec((tnr, G), lambda i: (i, 0)),            # region ids
            pl.BlockSpec((2 * G, 128), lambda i: (0, 0)),        # M
            pl.BlockSpec((G, kdim), lambda i: (0, 0)),           # REP
            pl.BlockSpec((kdim, 128), lambda i: (0, 0)),         # TT
            pl.BlockSpec((1, kdim), lambda i: (0, 0)),           # riota
            pl.BlockSpec((1, 128), lambda i: (0, 0)),            # bias pattern
        ],
        out_specs=pl.BlockSpec((tnr, 128), lambda i: (i, 0)),
        compiler_params=pltpu.CompilerParams(
            dimension_semantics=("parallel",),
            vmem_limit_bytes=32 * 1024 * 1024),
    )(loc8, rid8, m_mat, rep_mat, tt_mat, riota, bias_pat)

    # Output slab already has row-major [token, feature] order -> pure reshape.
    out_flat = out_rows.reshape(n8_pad * G, feat)
    if n8_pad * G != N:
        out_flat = out_flat[:N]
    return out_flat.reshape(B, S, feat)


def init_params(key, region_num):
    k1, k2, k3 = jax.random.split(key, 3)
    # nn.Linear(2, 6): weight [6, 2] (torch layout), bias [6].
    coord_w_t = jax.random.normal(k1, (6, 2), jnp.float32) * 0.1
    coord_b = jax.random.normal(k2, (6,), jnp.float32) * 0.1
    # nn.Embedding(region_num, 10).
    region_table = jax.random.normal(k3, (region_num, 10), jnp.float32)
    return {"coord_w_t": coord_w_t, "coord_b": coord_b,
            "region_table": region_table}


def reference(location, region_id, params, geo_range):
    """Pure-JAX reference of the PyTorch forward (elementwise, no MXU)."""
    (lat_min, lat_max), (lon_min, lon_max) = geo_range
    lat = (location[..., 0:1] - lat_min) / (lat_max - lat_min)   # [B, S, 1]
    lon = (location[..., 1:2] - lon_min) / (lon_max - lon_min)   # [B, S, 1]
    wt = params["coord_w_t"]
    coord = lat * wt[:, 0] + lon * wt[:, 1] + params["coord_b"]  # [B, S, 6]
    region = params["region_table"][region_id]                   # [B, S, 10]
    return jnp.concatenate([coord, region], axis=-1)


if __name__ == "__main__":
    geo_range = ((30.0, 32.0), (120.0, 122.0))
    region_num = 12

    key = jax.random.PRNGKey(0)
    kp, k1, k2, k3, k4, k5, k6 = jax.random.split(key, 7)
    params = init_params(kp, region_num)

    def make_inputs(kla, klo, kri, B, S):
        lat = jax.random.uniform(kla, (B, S, 1), minval=30.0, maxval=32.0)
        lon = jax.random.uniform(klo, (B, S, 1), minval=120.0, maxval=122.0)
        loc = jnp.concatenate([lat, lon], axis=-1).astype(jnp.float32)
        rid = jax.random.randint(kri, (B, S), 0, region_num, dtype=jnp.int32)
        return loc, rid

    # Small shape implied by the module: batch=2, seq=8.
    loc, rid = make_inputs(k1, k2, k3, 2, 8)
    out = jax.block_until_ready(geo_key_encoder(loc, rid, params, geo_range))
    ref = reference(loc, rid, params, geo_range)
    assert out.shape == (2, 8, 16), out.shape
    assert jnp.allclose(out, ref, atol=3e-5, rtol=1e-5), "mismatch (small case)"

    # Second check exercising multi-step grid, multi-chunk inner loop, padding.
    loc2, rid2 = make_inputs(k4, k5, k6, 2, 3000)
    out2 = jax.block_until_ready(geo_key_encoder(loc2, rid2, params, geo_range))
    ref2 = reference(loc2, rid2, params, geo_range)
    assert out2.shape == (2, 3000, 16), out2.shape
    assert jnp.allclose(out2, ref2, atol=3e-5, rtol=1e-5), "mismatch (large case)"

    print("KERNEL_OK")
</pallas_src>

<mosaic_0001>
module attributes {stable_mosaic.version = 11 : i64} {
  func.func @_geo_key_kernel(%arg0: i32, %arg1: memref<8x16xf32, #tpu.memory_space<vmem>>, %arg2: memref<8x8xi32, #tpu.memory_space<vmem>>, %arg3: memref<16x128xf32, #tpu.memory_space<vmem>>, %arg4: memref<8x128xf32, #tpu.memory_space<vmem>>, %arg5: memref<128x128xf32, #tpu.memory_space<vmem>>, %arg6: memref<1x128xf32, #tpu.memory_space<vmem>>, %arg7: memref<1x128xf32, #tpu.memory_space<vmem>>, %arg8: memref<8x128xf32, #tpu.memory_space<vmem>>) attributes {dimension_semantics = [#tpu.dimension_semantics<parallel>], iteration_bounds = array<i64: 1>, scalar_prefetch = 0 : i64, scratch_operands = 0 : i64, tpu.core_type = #tpu.core_type<tc>, window_params = [{transform_indices = @transform_0, window_bounds = array<i64: 8, 16>}, {transform_indices = @transform_1, window_bounds = array<i64: 8, 8>}, {pipeline_mode = #tpu.pipeline_mode<synchronous>, transform_indices = @transform_2, window_bounds = array<i64: 16, 128>}, {pipeline_mode = #tpu.pipeline_mode<synchronous>, transform_indices = @transform_3, window_bounds = array<i64: 8, 128>}, {pipeline_mode = #tpu.pipeline_mode<synchronous>, transform_indices = @transform_4, window_bounds = array<i64: 128, 128>}, {pipeline_mode = #tpu.pipeline_mode<synchronous>, transform_indices = @transform_5, window_bounds = array<i64: 1, 128>}, {pipeline_mode = #tpu.pipeline_mode<synchronous>, transform_indices = @transform_6, window_bounds = array<i64: 1, 128>}, {transform_indices = @transform_7, window_bounds = array<i64: 8, 128>}]} {
    %c0 = arith.constant 0 : index
    %c0_0 = arith.constant 0 : index
    %0 = vector.load %arg3[%c0, %c0_0] : memref<16x128xf32, #tpu.memory_space<vmem>>, vector<16x128xf32>
    %c0_1 = arith.constant 0 : index
    %c0_2 = arith.constant 0 : index
    %1 = vector.load %arg4[%c0_1, %c0_2] : memref<8x128xf32, #tpu.memory_space<vmem>>, vector<8x128xf32>
    %c0_3 = arith.constant 0 : index
    %c0_4 = arith.constant 0 : index
    %2 = vector.load %arg5[%c0_3, %c0_4] : memref<128x128xf32, #tpu.memory_space<vmem>>, vector<128x128xf32>
    %c0_5 = arith.constant 0 : index
    %c0_6 = arith.constant 0 : index
    %3 = vector.load %arg6[%c0_5, %c0_6] : memref<1x128xf32, #tpu.memory_space<vmem>>, vector<1x128xf32>
    %c0_7 = arith.constant 0 : index
    %c0_8 = arith.constant 0 : index
    %4 = vector.load %arg7[%c0_7, %c0_8] : memref<1x128xf32, #tpu.memory_space<vmem>>, vector<1x128xf32>
    %c0_i32 = arith.constant 0 : i32
    %c8_i32 = arith.constant 8 : i32
    %5 = arith.muli %c0_i32, %c8_i32 : i32
    %6 = tpu.assume_multiple %5, 8 : i32
    %7 = arith.index_cast %6 : i32 to index
    %c0_9 = arith.constant 0 : index
    %8 = vector.load %arg1[%7, %c0_9] : memref<8x16xf32, #tpu.memory_space<vmem>>, vector<8x16xf32>
    %9 = arith.index_cast %6 : i32 to index
    %c0_10 = arith.constant 0 : index
    %10 = vector.load %arg2[%9, %c0_10] : memref<8x8xi32, #tpu.memory_space<vmem>>, vector<8x8xi32>
    %11 = arith.sitofp %10 : vector<8x8xi32> to vector<8x8xf32>
    %cst = arith.constant dense<0.000000e+00> : vector<8x128xf32>
    %12 = tpu.matmul %8, %0, %cst {dimension_numbers = #tpu.dot_dimension_numbers<[1], [0], [0], [1], [0, 0, 1, 1], [], []>} : vector<8x16xf32>, vector<16x128xf32>, vector<8x128xf32> -> vector<8x128xf32>
    %cst_11 = arith.constant dense<0.000000e+00> : vector<8x128xf32>
    %13 = tpu.matmul %11, %1, %cst_11 {dimension_numbers = #tpu.dot_dimension_numbers<[1], [0], [0], [1], [0, 0, 1, 1], [], []>} : vector<8x8xf32>, vector<8x128xf32>, vector<8x128xf32> -> vector<8x128xf32>
    %14 = vector.broadcast %3 : vector<1x128xf32> to vector<8x128xf32>
    %15 = arith.cmpf oeq, %13, %14 : vector<8x128xf32>
    %16 = arith.extui %15 : vector<8x128xi1> to vector<8x128xi32>
    %17 = arith.sitofp %16 : vector<8x128xi32> to vector<8x128xf32>
    %cst_12 = arith.constant dense<0.000000e+00> : vector<8x128xf32>
    %18 = tpu.matmul %17, %2, %cst_12 {dimension_numbers = #tpu.dot_dimension_numbers<[1], [0], [0], [1], [0, 0, 1, 1], [], []>} : vector<8x128xf32>, vector<128x128xf32>, vector<8x128xf32> -> vector<8x128xf32>
    %19 = arith.addf %12, %18 : vector<8x128xf32>
    %20 = vector.broadcast %4 : vector<1x128xf32> to vector<8x128xf32>
    %21 = arith.addf %19, %20 : vector<8x128xf32>
    %22 = arith.index_cast %6 : i32 to index
    %c0_13 = arith.constant 0 : index
    %23 = vector.load %arg8[%22, %c0_13] : memref<8x128xf32, #tpu.memory_space<vmem>>, vector<8x128xf32>
    tpu.vector_store %arg8[%22, %c0_13], %21 {strides = array<i32>} : memref<8x128xf32, #tpu.memory_space<vmem>>, vector<8x128xf32>,
    %c1_i32 = arith.constant 1 : i32
    return
  }
  func.func @transform_0(%arg0: i32) -> (i32, i32) {
    %c0_i32 = arith.constant 0 : i32
    %c0_i32_0 = arith.constant 0 : i32
    return %arg0, %c0_i32 : i32, i32
  }
  func.func @transform_1(%arg0: i32) -> (i32, i32) {
    %c0_i32 = arith.constant 0 : i32
    %c0_i32_0 = arith.constant 0 : i32
    return %arg0, %c0_i32 : i32, i32
  }
  func.func @transform_2(%arg0: i32) -> (i32, i32) {
    %c0_i32 = arith.constant 0 : i32
    %c0_i32_0 = arith.constant 0 : i32
    %c0_i32_1 = arith.constant 0 : i32
    return %c0_i32, %c0_i32_0 : i32, i32
  }
  func.func @transform_3(%arg0: i32) -> (i32, i32) {
    %c0_i32 = arith.constant 0 : i32
    %c0_i32_0 = arith.constant 0 : i32
    %c0_i32_1 = arith.constant 0 : i32
    return %c0_i32, %c0_i32_0 : i32, i32
  }
  func.func @transform_4(%arg0: i32) -> (i32, i32) {
    %c0_i32 = arith.constant 0 : i32
    %c0_i32_0 = arith.constant 0 : i32
    %c0_i32_1 = arith.constant 0 : i32
    return %c0_i32, %c0_i32_0 : i32, i32
  }
  func.func @transform_5(%arg0: i32) -> (i32, i32) {
    %c0_i32 = arith.constant 0 : i32
    %c0_i32_0 = arith.constant 0 : i32
    %c0_i32_1 = arith.constant 0 : i32
    return %c0_i32, %c0_i32_0 : i32, i32
  }
  func.func @transform_6(%arg0: i32) -> (i32, i32) {
    %c0_i32 = arith.constant 0 : i32
    %c0_i32_0 = arith.constant 0 : i32
    %c0_i32_1 = arith.constant 0 : i32
    return %c0_i32, %c0_i32_0 : i32, i32
  }
  func.func @transform_7(%arg0: i32) -> (i32, i32) {
    %c0_i32 = arith.constant 0 : i32
    %c0_i32_0 = arith.constant 0 : i32
    return %arg0, %c0_i32 : i32, i32
  }
}

</mosaic_0001>

<llo_original>
// kernel: tpu_custom_call.1
$region0: #{tpu_custom_call.1}
  #allocation0 [shape = 'u32[]', space=smem, size = 0x4, offset = 0x4, fixed_abs, tag = 'smem constant byte address 0x4 - core index']
  #allocation1 [shape = 'u32[144,128]{1,0:T(1,128)}', space=vmem, size = 0x12000, scoped, tag = 'internal scratch']
  %s0 = inlined_call_operand.hbm [shape: f32[8,16], index: 0, kind: input, shape index: {}]
  %s1 = inlined_call_operand.hbm [shape: s32[8,8], index: 1, kind: input, shape index: {}]
  %s2 = inlined_call_operand.hbm [shape: f32[16,128], index: 2, kind: input, shape index: {}]
  %s3 = inlined_call_operand.vmem [shape: f32[8,128], index: 3, kind: input, shape index: {}]
  %s4 = inlined_call_operand.hbm [shape: f32[128,128], index: 4, kind: input, shape index: {}]
  %s5 = inlined_call_operand.vmem [shape: f32[1,128], index: 5, kind: input, shape index: {}]
  %s6 = inlined_call_operand.vmem [shape: f32[1,128], index: 6, kind: input, shape index: {}]
  %s7 = inlined_call_operand.hbm [shape: f32[8,128], index: 7, kind: output, shape index: {}]
  %s8 = sld [smem:[#allocation0]]
  $region54: #{tpu_custom_call.1} parent=0
    _
  %s10 = ssub.s32 1, %s8
  %s11 = scalar_select 0, %s10, %s8
  $region1: #{tpu_custom_call.1} parent=0
    #allocation2 [shape = 'u8[4096]{0}', space=vmem, size = 0x1000, scoped, tag = 'input window, operand 0, single buffered']
    #allocation3 [shape = 's32[1]{0}', space=sflag, size = 0x4, scoped, tag = 'scoped memory for tpu_custom_call.1']
    #allocation4 [shape = 's32[1]{0}', space=sflag, size = 0x4, scoped, tag = 'scoped memory for tpu_custom_call.1']
    #allocation5 [shape = 'u8[4096]{0}', space=vmem, size = 0x1000, scoped, tag = 'input window, operand 1, single buffered']
    #allocation6 [shape = 's32[1]{0}', space=sflag, size = 0x4, scoped, tag = 'scoped memory for tpu_custom_call.1']
    #allocation7 [shape = 'u8[8192]{0}', space=vmem, size = 0x2000, scoped, tag = 'input window, operand 2, single buffered']
    #allocation8 [shape = 'u8[65536]{0}', space=vmem, size = 0x10000, scoped, tag = 'input window, operand 4, single buffered']
    #allocation9 [shape = 's32[1]{0}', space=sflag, size = 0x4, scoped, tag = 'scoped memory for tpu_custom_call.1']
    #allocation10 [shape = 'u8[4096]{0}', space=vmem, size = 0x1000, scoped, tag = 'output window, operand 0, single buffered']
    %12 = vsyncpa [#allocation3], 0
    %13 = vsyncpa [#allocation6], 0
    %14 = vsyncpa [#allocation9], 0
    %15 = vsyncpa [#allocation4], 0
    // Predicated region
    $region2: #{tpu_custom_call.1} parent=1 // pred_check
      _
    $region3: #{tpu_custom_call.1} parent=1 // pred_check_branch
      %17 = sbr.rel (0) target = $region5
    $region4: #{tpu_custom_call.1} parent=1 // pred_region
      %s19 = ssub.s32 128, 128
      %20 = vsyncadd [#allocation3], %s19
      %s22 = sshll.u32 [#allocation2], 4
      %s23 = int_to_ptr.vmem [resolvable:$true] %s22
      %25 = dma.hbm_to_vmem [thread:$0]  %s0, 128, %s23, [#allocation3]
    $region5: #{tpu_custom_call.1} parent=1 // pred_fallthru
      _
    // Predicated region
    $region6: #{tpu_custom_call.1} parent=1 // pred_check
      _
    $region7: #{tpu_custom_call.1} parent=1 // pred_check_branch
      %27 = sbr.rel (0) target = $region9
    $region8: #{tpu_custom_call.1} parent=1 // pred_region
      %s29 = ssub.s32 128, 128
      %30 = vsyncadd [#allocation6], %s29
      %s32 = sshll.u32 [#allocation5], 4
      %s33 = int_to_ptr.vmem [resolvable:$true] %s32
      %35 = dma.hbm_to_vmem [thread:$0]  %s1, 128, %s33, [#allocation6]
    $region9: #{tpu_custom_call.1} parent=1 // pred_fallthru
      _
    // Predicated region
    $region10: #{tpu_custom_call.1} parent=1 // pred_check
      _
    $region11: #{tpu_custom_call.1} parent=1 // pred_check_branch
      %37 = sbr.rel (0) target = $region13
    $region12: #{tpu_custom_call.1} parent=1 // pred_region
      %s39 = ssub.s32 256, 256
      %40 = vsyncadd [#allocation6], %s39
      %s41 = sshll.u32 [#allocation7], 4
      %s42 = int_to_ptr.vmem [resolvable:$true] %s41
      %47 = dma.hbm_to_vmem [thread:$0]  %s2, 256, %s42, [#allocation6], 128, 128, 8
    $region13: #{tpu_custom_call.1} parent=1 // pred_fallthru
      _
    // Predicated region
    $region14: #{tpu_custom_call.1} parent=1 // pred_check
      _
    $region15: #{tpu_custom_call.1} parent=1 // pred_check_branch
      %49 = sbr.rel (0) target = $region17
    $region16: #{tpu_custom_call.1} parent=1 // pred_region
      _
    $region17: #{tpu_custom_call.1} parent=1 // pred_fallthru
      _
    // Predicated region
    $region18: #{tpu_custom_call.1} parent=1 // pred_check
      _
    $region19: #{tpu_custom_call.1} parent=1 // pred_check_branch
      %51 = sbr.rel (0) target = $region21
    $region20: #{tpu_custom_call.1} parent=1 // pred_region
      %s53 = ssub.s32 2048, 2048
      %54 = vsyncadd [#allocation9], %s53
      %s55 = sshll.u32 [#allocation8], 4
      %s56 = int_to_ptr.vmem [resolvable:$true] %s55
      %61 = dma.hbm_to_vmem [thread:$0]  %s4, 2048, %s56, [#allocation9], 128, 128, 8
    $region21: #{tpu_custom_call.1} parent=1 // pred_fallthru
      _
    // Predicated region
    $region22: #{tpu_custom_call.1} parent=1 // pred_check
      _
    $region23: #{tpu_custom_call.1} parent=1 // pred_check_branch
      %63 = sbr.rel (0) target = $region25
    $region24: #{tpu_custom_call.1} parent=1 // pred_region
      _
    $region25: #{tpu_custom_call.1} parent=1 // pred_fallthru
      _
    // Predicated region
    $region26: #{tpu_custom_call.1} parent=1 // pred_check
      _
    $region27: #{tpu_custom_call.1} parent=1 // pred_check_branch
      %65 = sbr.rel (0) target = $region29
    $region28: #{tpu_custom_call.1} parent=1 // pred_region
      _
    $region29: #{tpu_custom_call.1} parent=1 // pred_fallthru
      _
    // Predicated region
    $region30: #{tpu_custom_call.1} parent=1 // pred_check
      _
    $region31: #{tpu_custom_call.1} parent=1 // pred_check_branch
      %67 = sbr.rel (0) target = $region33
    $region32: #{tpu_custom_call.1} parent=1 // pred_region
      %68 = dma.done [#allocation3], 128
    $region33: #{tpu_custom_call.1} parent=1 // pred_fallthru
      _
    // Predicated region
    $region34: #{tpu_custom_call.1} parent=1 // pred_check
      _
    $region35: #{tpu_custom_call.1} parent=1 // pred_check_branch
      %70 = sbr.rel (0) target = $region37
    $region36: #{tpu_custom_call.1} parent=1 // pred_region
      %71 = dma.done [#allocation6], 128
    $region37: #{tpu_custom_call.1} parent=1 // pred_fallthru
      _
    // Predicated region
    $region38: #{tpu_custom_call.1} parent=1 // pred_check
      _
    $region39: #{tpu_custom_call.1} parent=1 // pred_check_branch
      %73 = sbr.rel (0) target = $region41
    $region40: #{tpu_custom_call.1} parent=1 // pred_region
      %74 = dma.done [#allocation6], 256
    $region41: #{tpu_custom_call.1} parent=1 // pred_fallthru
      _
    // Predicated region
    $region42: #{tpu_custom_call.1} parent=1 // pred_check
      _
    $region43: #{tpu_custom_call.1} parent=1 // pred_check_branch
      %76 = sbr.rel (0) target = $region45
    $region44: #{tpu_custom_call.1} parent=1 // pred_region
      %77 = dma.done [#allocation9], 2048
    $region45: #{tpu_custom_call.1} parent=1 // pred_fallthru
      _
    %v78 = vld [vmem:[#allocation7] sm:$0xff]
    %v79 = vld [vmem:[#allocation7 + $0x8] sm:$0xff]
    %v80 = vld [vmem:[%s3] sm:$0xff]
    %v81 = vld [vmem:[#allocation8] sm:$0xff]
    %v82 = vld [vmem:[#allocation8 + $0x8] sm:$0xff]
    %v83 = vld [vmem:[#allocation8 + $0x10] sm:$0xff]
    %v84 = vld [vmem:[#allocation8 + $0x18] sm:$0xff]
    %v85 = vld [vmem:[#allocation8 + $0x20] sm:$0xff]
    %v86 = vld [vmem:[#allocation8 + $0x28] sm:$0xff]
    %v87 = vld [vmem:[#allocation8 + $0x30] sm:$0xff]
    %v88 = vld [vmem:[#allocation8 + $0x38] sm:$0xff]
    %v89 = vld [vmem:[#allocation8 + $0x40] sm:$0xff]
    %v90 = vld [vmem:[#allocation8 + $0x48] sm:$0xff]
    %v91 = vld [vmem:[#allocation8 + $0x50] sm:$0xff]
    %v92 = vld [vmem:[#allocation8 + $0x58] sm:$0xff]
    %v93 = vld [vmem:[#allocation8 + $0x60] sm:$0xff]
    %v94 = vld [vmem:[#allocation8 + $0x68] sm:$0xff]
    %v95 = vld [vmem:[#allocation8 + $0x70] sm:$0xff]
    %v96 = vld [vmem:[#allocation8 + $0x78] sm:$0xff]
    %v97 = vld [vmem:[%s5] sm:$0x1]
    %v98 = vld [vmem:[%s6] sm:$0x1]
    %v99 = vld [vmem:[#allocation2] sm:$0xff]
    %v100 = vld [vmem:[#allocation5] sm:$0xff]
    %v101 = vcvt.s32.f32 %v100
    %vm102 = vcmask 64512
    %v104 = vsel %vm102, %v101, 0
    %106 = vmatprep.subr.mxu0 0.0
    %107 = vmatpush1.msra.mxu0 %v80
    %108 = vmatprep.subr.mxu0 0.0
    %109 = vmatpush1.msra.mxu0 0.0
    %110 = vmatprep.subr.mxu0 0.0
    %111 = vmatpush1.msra.mxu0 0.0
    %112 = vmatprep.subr.mxu0 0.0
    %113 = vmatpush1.msra.mxu0 0.0
    %114 = vmatprep.subr.mxu0 0.0
    %115 = vmatpush1.msra.mxu0 0.0
    %116 = vmatprep.subr.mxu0 0.0
    %117 = vmatpush1.msra.mxu0 0.0
    %118 = vmatprep.subr.mxu0 0.0
    %119 = vmatpush1.msra.mxu0 0.0
    %120 = vmatprep.subr.mxu0 0.0
    %121 = vmatpush1.msra.mxu0 0.0
    %122 = vmatprep.subr.mxu0 0.0
    %123 = vmatpush1.msra.mxu0 0.0
    %124 = vmatprep.subr.mxu0 0.0
    %125 = vmatpush1.msra.mxu0 0.0
    %126 = vmatprep.subr.mxu0 0.0
    %127 = vmatpush1.msra.mxu0 0.0
    %128 = vmatprep.subr.mxu0 0.0
    %129 = vmatpush1.msra.mxu0 0.0
    %130 = vmatprep.subr.mxu0 0.0
    %131 = vmatpush1.msra.mxu0 0.0
    %132 = vmatprep.subr.mxu0 0.0
    %133 = vmatpush1.msra.mxu0 0.0
    %134 = vmatprep.subr.mxu0 0.0
    %135 = vmatpush1.msra.mxu0 0.0
    %136 = vmatprep.subr.mxu0 0.0
    %137 = vmatpush1.msra.mxu0 0.0
    %138 = vmatprep.subr.mxu0 0.0
    %139 = vmatpush1.msra.mxu0 0.0
    %140 = vmatprep.subr.mxu0 0.0
    %141 = vmatpush1.msra.mxu0 0.0
    %142 = vmatprep.subr.mxu0 0.0
    %143 = vmatpush1.msra.mxu0 0.0
    %144 = vmatprep.subr.mxu0 0.0
    %145 = vmatpush1.msra.mxu0 0.0
    %146 = vmatprep.subr.mxu0 0.0
    %147 = vmatpush1.msra.mxu0 0.0
    %148 = vmatprep.subr.mxu0 0.0
    %149 = vmatpush1.msra.mxu0 0.0
    %150 = vmatprep.subr.mxu0 0.0
    %151 = vmatpush1.msra.mxu0 0.0
    %152 = vmatprep.subr.mxu0 0.0
    %153 = vmatpush1.msra.mxu0 0.0
    %154 = vmatprep.subr.mxu0 0.0
    %155 = vmatpush1.msra.mxu0 0.0
    %156 = vmatprep.subr.mxu0 0.0
    %157 = vmatpush1.msra.mxu0 0.0
    %158 = vmatprep.subr.mxu0 0.0
    %159 = vmatpush1.msra.mxu0 0.0
    %160 = vmatprep.subr.mxu0 0.0
    %161 = vmatpush1.msra.mxu0 0.0
    %162 = vmatprep.subr.mxu0 0.0
    %163 = vmatpush1.msra.mxu0 0.0
    %164 = vmatprep.subr.mxu0 0.0
    %165 = vmatpush1.msra.mxu0 0.0
    %166 = vmatprep.subr.mxu0 0.0
    %167 = vmatpush1.msra.mxu0 0.0
    %168 = vmatprep.subr.mxu0 0.0
    %169 = vmatpush1.msra.mxu0 0.0
    %170 = vmatprep.mubr.f32.mxu0 0.0
    %171 = vmatmul.mubr.f32.gmra.mrb[0].mxu0 %v104
    %v172 = vpop.f32.mrb[0].mxu0
    %v173 = vadd.f32 0.0, %v172
    %v174 = vpop.f32.mrb[0].mxu0
    %175 = vdwg.mxu0
    %v177 = vlaneseq
    %v178 = vshrl.u32 %v177, 7
    %v179 = vsub.s32 0, %v178
    %v180 = vrot.slane %v97, %v179
    %vm182 = vcmp.eq.f32.partialorder %v173, %v180
    %v183 = vsel %vm182, 1, 0
    %v184 = vcvt.s32.f32 %v183
    %185 = vmatprep.subr.mxu0 0.0
    %186 = vmatpush1.msra.mxu0 %v81
    %187 = vmatprep.subr.mxu0 0.0
    %188 = vmatpush1.msra.mxu0 %v82
    %189 = vmatprep.subr.mxu0 0.0
    %190 = vmatpush1.msra.mxu0 %v83
    %191 = vmatprep.subr.mxu0 0.0
    %192 = vmatpush1.msra.mxu0 %v84
    %193 = vmatprep.subr.mxu0 0.0
    %194 = vmatpush1.msra.mxu0 %v85
    %195 = vmatprep.subr.mxu0 0.0
    %196 = vmatpush1.msra.mxu0 %v86
    %197 = vmatprep.subr.mxu0 0.0
    %198 = vmatpush1.msra.mxu0 %v87
    %199 = vmatprep.subr.mxu0 0.0
    %200 = vmatpush1.msra.mxu0 %v88
    %201 = vmatprep.subr.mxu0 0.0
    %202 = vmatpush1.msra.mxu0 %v89
    %203 = vmatprep.subr.mxu0 0.0
    %204 = vmatpush1.msra.mxu0 %v90
    %205 = vmatprep.subr.mxu0 0.0
    %206 = vmatpush1.msra.mxu0 %v91
    %207 = vmatprep.subr.mxu0 0.0
    %208 = vmatpush1.msra.mxu0 %v92
    %209 = vmatprep.subr.mxu0 0.0
    %210 = vmatpush1.msra.mxu0 %v93
    %211 = vmatprep.subr.mxu0 0.0
    %212 = vmatpush1.msra.mxu0 %v94
    %213 = vmatprep.subr.mxu0 0.0
    %214 = vmatpush1.msra.mxu0 %v95
    %215 = vmatprep.subr.mxu0 0.0
    %216 = vmatpush1.msra.mxu0 %v96
    %217 = vmatprep.subr.mxu0 0.0
    %218 = vmatpush1.msra.mxu0 0.0
    %219 = vmatprep.subr.mxu0 0.0
    %220 = vmatpush1.msra.mxu0 0.0
    %221 = vmatprep.subr.mxu0 0.0
    %222 = vmatpush1.msra.mxu0 0.0
    %223 = vmatprep.subr.mxu0 0.0
    %224 = vmatpush1.msra.mxu0 0.0
    %225 = vmatprep.subr.mxu0 0.0
    %226 = vmatpush1.msra.mxu0 0.0
    %227 = vmatprep.subr.mxu0 0.0
    %228 = vmatpush1.msra.mxu0 0.0
    %229 = vmatprep.subr.mxu0 0.0
    %230 = vmatpush1.msra.mxu0 0.0
    %231 = vmatprep.subr.mxu0 0.0
    %232 = vmatpush1.msra.mxu0 0.0
    %233 = vmatprep.subr.mxu0 0.0
    %234 = vmatpush1.msra.mxu0 0.0
    %235 = vmatprep.subr.mxu0 0.0
    %236 = vmatpush1.msra.mxu0 0.0
    %237 = vmatprep.subr.mxu0 0.0
    %238 = vmatpush1.msra.mxu0 0.0
    %239 = vmatprep.subr.mxu0 0.0
    %240 = vmatpush1.msra.mxu0 0.0
    %241 = vmatprep.subr.mxu0 0.0
    %242 = vmatpush1.msra.mxu0 0.0
    %243 = vmatprep.subr.mxu0 0.0
    %244 = vmatpush1.msra.mxu0 0.0
    %245 = vmatprep.subr.mxu0 0.0
    %246 = vmatpush1.msra.mxu0 0.0
    %247 = vmatprep.subr.mxu0 0.0
    %248 = vmatpush1.msra.mxu0 0.0
    %249 = vmatprep.mubr.f32.mxu0 0.0
    %250 = vmatmul.mubr.f32.gmra.mrb[0].mxu0 %v184
    %v251 = vpop.f32.mrb[0].mxu0
    %v252 = vadd.f32 0.0, %v251
    %v253 = vpop.f32.mrb[0].mxu0
    %254 = vdwg.mxu0
    %vm255 = vcmask 130048
    %v257 = vsel %vm255, %v99, 0
    %259 = vmatprep.subr.mxu0 0.0
    %260 = vmatpush1.msra.mxu0 %v78
    %261 = vmatprep.subr.mxu0 0.0
    %262 = vmatpush1.msra.mxu0 %v79
    %263 = vmatprep.subr.mxu0 0.0
    %264 = vmatpush1.msra.mxu0 0.0
    %265 = vmatprep.subr.mxu0 0.0
    %266 = vmatpush1.msra.mxu0 0.0
    %267 = vmatprep.subr.mxu0 0.0
    %268 = vmatpush1.msra.mxu0 0.0
    %269 = vmatprep.subr.mxu0 0.0
    %270 = vmatpush1.msra.mxu0 0.0
    %271 = vmatprep.subr.mxu0 0.0
    %272 = vmatpush1.msra.mxu0 0.0
    %273 = vmatprep.subr.mxu0 0.0
    %274 = vmatpush1.msra.mxu0 0.0
    %275 = vmatprep.subr.mxu0 0.0
    %276 = vmatpush1.msra.mxu0 0.0
    %277 = vmatprep.subr.mxu0 0.0
    %278 = vmatpush1.msra.mxu0 0.0
    %279 = vmatprep.subr.mxu0 0.0
    %280 = vmatpush1.msra.mxu0 0.0
    %281 = vmatprep.subr.mxu0 0.0
    %282 = vmatpush1.msra.mxu0 0.0
    %283 = vmatprep.subr.mxu0 0.0
    %284 = vmatpush1.msra.mxu0 0.0
    %285 = vmatprep.subr.mxu0 0.0
    %286 = vmatpush1.msra.mxu0 0.0
    %287 = vmatprep.subr.mxu0 0.0
    %288 = vmatpush1.msra.mxu0 0.0
    %289 = vmatprep.subr.mxu0 0.0
    %290 = vmatpush1.msra.mxu0 0.0
    %291 = vmatprep.subr.mxu0 0.0
    %292 = vmatpush1.msra.mxu0 0.0
    %293 = vmatprep.subr.mxu0 0.0
    %294 = vmatpush1.msra.mxu0 0.0
    %295 = vmatprep.subr.mxu0 0.0
    %296 = vmatpush1.msra.mxu0 0.0
    %297 = vmatprep.subr.mxu0 0.0
    %298 = vmatpush1.msra.mxu0 0.0
    %299 = vmatprep.subr.mxu0 0.0
    %300 = vmatpush1.msra.mxu0 0.0
    %301 = vmatprep.subr.mxu0 0.0
    %302 = vmatpush1.msra.mxu0 0.0
    %303 = vmatprep.subr.mxu0 0.0
    %304 = vmatpush1.msra.mxu0 0.0
    %305 = vmatprep.subr.mxu0 0.0
    %306 = vmatpush1.msra.mxu0 0.0
    %307 = vmatprep.subr.mxu0 0.0
    %308 = vmatpush1.msra.mxu0 0.0
    %309 = vmatprep.subr.mxu0 0.0
    %310 = vmatpush1.msra.mxu0 0.0
    %311 = vmatprep.subr.mxu0 0.0
    %312 = vmatpush1.msra.mxu0 0.0
    %313 = vmatprep.subr.mxu0 0.0
    %314 = vmatpush1.msra.mxu0 0.0
    %315 = vmatprep.subr.mxu0 0.0
    %316 = vmatpush1.msra.mxu0 0.0
    %317 = vmatprep.subr.mxu0 0.0
    %318 = vmatpush1.msra.mxu0 0.0
    %319 = vmatprep.subr.mxu0 0.0
    %320 = vmatpush1.msra.mxu0 0.0
    %321 = vmatprep.subr.mxu0 0.0
    %322 = vmatpush1.msra.mxu0 0.0
    %323 = vmatprep.mubr.f32.mxu0 0.0
    %324 = vmatmul.mubr.f32.gmra.mrb[0].mxu0 %v257
    %v325 = vpop.f32.mrb[0].mxu0
    %v326 = vadd.f32 %v252, %v325
    %v327 = vpop.f32.mrb[0].mxu0
    %328 = vdwg.mxu0
    %v330 = vlaneseq
    %v331 = vshrl.u32 %v330, 7
    %v332 = vsub.s32 0, %v331
    %v333 = vrot.slane %v98, %v332
    %v335 = vadd.f32 %v326, %v333
    %336 = vst [vmem:[#allocation10] sm:$0xff] %v335
    // Predicated region
    $region46: #{tpu_custom_call.1} parent=1 // pred_check
      _
    $region47: #{tpu_custom_call.1} parent=1 // pred_check_branch
      %338 = sbr.rel (0) target = $region49
    $region48: #{tpu_custom_call.1} parent=1 // pred_region
      %s340 = ssub.s32 128, 128
      %341 = vsyncadd [#allocation4], %s340
      %s343 = sshll.u32 [#allocation10], 4
      %s344 = int_to_ptr.vmem [resolvable:$true] %s343
      %346 = dma.vmem_to_hbm [thread:$0]  %s344, 128, %s7, [#allocation4]
    $region49: #{tpu_custom_call.1} parent=1 // pred_fallthru
      _
    // Predicated region
    $region50: #{tpu_custom_call.1} parent=1 // pred_check
      _
    $region51: #{tpu_custom_call.1} parent=1 // pred_check_branch
      %348 = sbr.rel (0) target = $region53
    $region52: #{tpu_custom_call.1} parent=1 // pred_region
      %349 = dma.done [#allocation4], 128
    $region53: #{tpu_custom_call.1} parent=1 // pred_fallthru
      _
    %350 = vsyncpa [#allocation3], 1
    %351 = vsyncpa [#allocation6], 1
    %352 = vsyncpa [#allocation9], 1
    %353 = vsyncpa [#allocation4], 1

</llo_original>
